<compile_context>
chip_gen: v7x
topology: tpu7x:2x2x1
jax: 0.10.0
libtpu: 0.0.40
codegen_flags: <defaults>
</compile_context>

<pallas_src>
import jax
import jax.numpy as jnp
from jax import lax
from jax.experimental import pallas as pl
from jax.experimental.pallas import tpu as pltpu


def _round_up(x, m):
    return ((x + m - 1) // m) * m


def _vmem_capacity_bytes():
    """Physical per-core VMEM; conservative fallback if the query is unavailable."""
    try:
        info = pltpu.get_tpu_info()
        cap = int(getattr(info, "vmem_capacity_bytes", 0) or 0)
        if cap > 0:
            return cap
    except Exception:
        pass
    return 64 * 1024 * 1024  # v7x-sized fallback: safe on every generation


def _vmem_need_bytes(tm, tv, d, h):
    """Rough per-step VMEM footprint under default double-buffering."""
    return (2 * tm * d * 2        # x row tile (bf16, double-buffered)
            + 2 * d * h * 2       # W1 (bf16, constant index, 2 bufs)
            + 2 * 8 * h * 4       # packed b1/gamma/beta (f32)
            + 2 * h * tv * 2      # W2 vocab stripe (bf16, double-buffered)
            + 2 * 8 * tv * 4      # b2 stripe (f32, padded to 8 sublanes)
            + 2 * tm * tv * 4     # output tile (f32, double-buffered)
            + tm * h * 2)         # persistent hn scratch (bf16)


def _select_tiles(n, d, h, v_pad, vmem_limit):
    """Generation-aware TM (row tile) / TV (vocab stripe) selection."""
    budget = int(vmem_limit * 0.85)
    if vmem_limit >= 80 * 1024 * 1024:      # v5e / v6e class (128 MiB physical)
        tm_cap, tv_cap = 512, 2048
    else:                                    # v7x class (64 MiB) or unknown
        tm_cap, tv_cap = 256, 1024

    tm_full = _round_up(max(n, 1), 16)       # all rows in one tile
    tm = min(tm_cap, tm_full)
    tv = min(tv_cap, v_pad)

    # Structural option: if every LayerNorm'ed row fits, keep them all resident
    # so the W2 stream is read from HBM exactly once.
    if tm_full <= 1024 and _vmem_need_bytes(tm_full, tv, d, h) <= budget:
        tm = tm_full

    # Shrink (vocab stripe first) if the estimate exceeds the VMEM budget.
    while _vmem_need_bytes(tm, tv, d, h) > budget and tv > 128:
        tv = max(128, ((tv // 2) // 128) * 128)
    while _vmem_need_bytes(tm, tv, d, h) > budget and tm > 16:
        tm = max(16, ((tm // 2) // 8) * 8)
    return tm, tv


def masklm_kernel(x_ref,      # (TM, D)  bf16  gathered masked rows (row tile)
                  w1_ref,     # (D, H)   bf16
                  bpack_ref,  # (8, H)   f32   rows 0/1/2 = b1 / gamma / beta
                  w2_ref,     # (H, TV)  bf16  W2 column stripe
                  b2_ref,     # (1, TV)  f32   b2 stripe
                  out_ref,    # (TM, TV) f32
                  hn_ref):    # scratch (TM, H) bf16, persistent across vocab stripes
    # Linear1 + ReLU + LayerNorm: once per row tile (first vocab stripe only).
    @pl.when(pl.program_id(1) == 0)
    def _():
        h = jnp.dot(x_ref[...], w1_ref[...], preferred_element_type=jnp.float32)
        bp = bpack_ref[...]
        h = jnp.maximum(h + bp[0:1, :], 0.0)
        mean = jnp.mean(h, axis=-1, keepdims=True)
        cent = h - mean
        var = jnp.mean(cent * cent, axis=-1, keepdims=True)     # biased variance
        hn = cent * lax.rsqrt(var + 1e-5)
        hn = hn * bp[1:2, :] + bp[2:3, :]
        # Note: zero-padded rows give var==0 -> rsqrt(1e-5); finite, and those
        # rows are never stored because the output array has only N rows.
        hn_ref[...] = hn.astype(hn_ref.dtype)

    # Linear2 on the current vocab stripe (lane-dense, multiple-of-128 wide).
    out = jnp.dot(hn_ref[...], w2_ref[...], preferred_element_type=jnp.float32)
    out_ref[...] = (out + b2_ref[...]).astype(out_ref.dtype)


def masklm_prepare_params(params):
    """One-time parameter prep (cast/pad/pack) hoisted out of the forward path."""
    w1, b1, gamma, beta, w2, b2 = params
    d, h = w1.shape
    v = w2.shape[1]
    v_pad = _round_up(max(v, 128), 128)

    w1_b = w1.astype(jnp.bfloat16)                                          # (D, H)
    w2_p = jnp.zeros((h, v_pad), jnp.bfloat16).at[:, :v].set(
        w2.astype(jnp.bfloat16))                                            # (H, V_pad)
    b2_p = jnp.zeros((1, v_pad), jnp.float32).at[:, :v].set(
        b2.reshape(1, v).astype(jnp.float32))                               # (1, V_pad)
    bpack = jnp.zeros((8, h), jnp.float32)
    bpack = bpack.at[0, :].set(b1.astype(jnp.float32))
    bpack = bpack.at[1, :].set(gamma.astype(jnp.float32))
    bpack = bpack.at[2, :].set(beta.astype(jnp.float32))
    return {"w1": w1_b, "bpack": bpack, "w2": w2_p, "b2": b2_p,
            "D": d, "H": h, "V": v, "V_pad": v_pad}


def masklm_forward(X, pred_positions, prepped):
    """X: (B, S, D) f32; pred_positions: (B, P) int32.  Returns (B, P, V) f32."""
    B, S, D = X.shape
    P = pred_positions.shape[1]
    N = B * P
    H, V, V_pad = prepped["H"], prepped["V"], prepped["V_pad"]
    assert prepped["D"] == D

    # --- gather masked positions in the wrapper (single XLA gather):
    #     flat index = batch_idx * S + position, same as the PyTorch advanced-index.
    batch_idx = jnp.repeat(jnp.arange(B, dtype=jnp.int32), P)
    flat_idx = batch_idx * S + pred_positions.reshape(-1).astype(jnp.int32)
    masked = jnp.take(X.reshape(B * S, D), flat_idx, axis=0)                # (N, D)

    # --- generation-aware tile sizes and VMEM budget ---
    vmem_cap = _vmem_capacity_bytes()
    vmem_limit = min((vmem_cap * 3) // 4, 112 * 1024 * 1024)
    TM, TV = _select_tiles(N, D, H, V_pad, vmem_limit)

    n_row_tiles = pl.cdiv(N, TM)
    n_vocab_tiles = pl.cdiv(V_pad, TV)
    N_x = n_row_tiles * TM

    # Pad only the (cheap) gathered-rows input; weights were padded at prep time.
    x_p = jnp.zeros((N_x, D), jnp.bfloat16).at[:N].set(masked.astype(jnp.bfloat16))

    # Output is emitted at logical shape (N, V): ragged edge blocks are masked by
    # Pallas, so no post-kernel slice/copy is needed and the reshape below is free.
    out = pl.pallas_call(
        masklm_kernel,
        out_shape=jax.ShapeDtypeStruct((N, V), jnp.float32),
        grid_spec=pltpu.PrefetchScalarGridSpec(
            num_scalar_prefetch=0,
            grid=(n_row_tiles, n_vocab_tiles),
            in_specs=[
                pl.BlockSpec((TM, D), lambda m, v: (m, 0)),    # gathered rows tile
                pl.BlockSpec((D, H), lambda m, v: (0, 0)),     # W1 (resident)
                pl.BlockSpec((8, H), lambda m, v: (0, 0)),     # b1/gamma/beta pack
                pl.BlockSpec((H, TV), lambda m, v: (0, v)),    # W2 column stripe
                pl.BlockSpec((1, TV), lambda m, v: (0, v)),    # b2 stripe
            ],
            out_specs=pl.BlockSpec((TM, TV), lambda m, v: (m, v)),
            scratch_shapes=[pltpu.VMEM((TM, H), jnp.bfloat16)],   # LayerNorm'd acts
        ),
        compiler_params=pltpu.CompilerParams(
            # Row tiles are independent -> megacore shards them (v7x);
            # vocab axis reuses the per-row-tile scratch -> must stay "arbitrary".
            dimension_semantics=("parallel", "arbitrary"),
            vmem_limit_bytes=int(vmem_limit),
        ),
    )(x_p, prepped["w1"], prepped["bpack"], prepped["w2"], prepped["b2"])

    return out.reshape(B, P, V)


def _reference(X, pred_positions, params):
    """Pure-JAX (f32) replica of the PyTorch forward, for verification."""
    w1, b1, gamma, beta, w2, b2 = params
    B, S, D = X.shape
    P = pred_positions.shape[1]
    bidx = jnp.repeat(jnp.arange(B), P)
    masked = X[bidx, pred_positions.reshape(-1)].reshape(B, P, D)
    h = jnp.maximum(masked @ w1 + b1, 0.0)
    mean = jnp.mean(h, axis=-1, keepdims=True)
    var = jnp.mean((h - mean) ** 2, axis=-1, keepdims=True)
    hn = (h - mean) / jnp.sqrt(var + 1e-5) * gamma + beta
    return hn @ w2 + b2


def _run_case(key, B, S, D, H, V, P):
    ks = jax.random.split(key, 8)
    X = jax.random.normal(ks[0], (B, S, D), jnp.float32)
    pred_positions = jax.random.randint(ks[1], (B, P), 0, S, dtype=jnp.int32)
    w1 = 0.05 * jax.random.normal(ks[2], (D, H), jnp.float32)
    b1 = 0.05 * jax.random.normal(ks[3], (H,), jnp.float32)
    gamma = 1.0 + 0.1 * jax.random.normal(ks[4], (H,), jnp.float32)
    beta = 0.05 * jax.random.normal(ks[5], (H,), jnp.float32)
    w2 = 0.05 * jax.random.normal(ks[6], (H, V), jnp.float32)
    b2 = 0.05 * jax.random.normal(ks[7], (V,), jnp.float32)
    params = (w1, b1, gamma, beta, w2, b2)

    prepped = masklm_prepare_params(params)       # one-time weight prep
    out = masklm_forward(X, pred_positions, prepped)
    jax.block_until_ready(out)

    ref = _reference(X, pred_positions, params)
    assert out.shape == (B, P, V), out.shape
    # bf16 MXU inputs with f32 accumulation -> allow bf16-level tolerance.
    assert jnp.allclose(out, ref, atol=3e-2, rtol=3e-2), "mismatch vs pure-JAX reference"


if __name__ == "__main__":
    key = jax.random.PRNGKey(0)
    k1, k2 = jax.random.split(key)
    # Small shapes consistent with the module's forward (B, S, D, H, V, P).
    _run_case(k1, B=2, S=16, D=64, H=64, V=256, P=8)     # single vocab stripe
    _run_case(k2, B=2, S=16, D=64, H=64, V=4096, P=8)    # multi-stripe: hn scratch reuse
    print("KERNEL_OK")
</pallas_src>

<mosaic_0001>
module attributes {stable_mosaic.version = 11 : i64} {
  func.func @masklm_kernel(%arg0: i32, %arg1: i32, %arg2: memref<16x64xbf16, #tpu.memory_space<vmem>>, %arg3: memref<64x64xbf16, #tpu.memory_space<vmem>>, %arg4: memref<8x64xf32, #tpu.memory_space<vmem>>, %arg5: memref<64x256xbf16, #tpu.memory_space<vmem>>, %arg6: memref<1x256xf32, #tpu.memory_space<vmem>>, %arg7: memref<16x256xf32, #tpu.memory_space<vmem>>, %arg8: memref<16x64xbf16, #tpu.memory_space<vmem>>) attributes {dimension_semantics = [#tpu.dimension_semantics<parallel>, #tpu.dimension_semantics<arbitrary>], iteration_bounds = array<i64: 1, 1>, scalar_prefetch = 0 : i64, scratch_operands = 1 : i64, tpu.core_type = #tpu.core_type<tc>, window_params = [{transform_indices = @transform_0, window_bounds = array<i64: 16, 64>}, {pipeline_mode = #tpu.pipeline_mode<synchronous>, transform_indices = @transform_1, window_bounds = array<i64: 64, 64>}, {pipeline_mode = #tpu.pipeline_mode<synchronous>, transform_indices = @transform_2, window_bounds = array<i64: 8, 64>}, {transform_indices = @transform_3, window_bounds = array<i64: 64, 256>}, {transform_indices = @transform_4, window_bounds = array<i64: 1, 256>}, {transform_indices = @transform_5, window_bounds = array<i64: 16, 256>}]} {
    %c0_i32 = arith.constant 0 : i32
    %0 = arith.cmpi eq, %arg1, %c0_i32 : i32
    %1 = arith.extui %0 : i1 to i32
    %c0_i32_0 = arith.constant 0 : i32
    %2 = arith.cmpi ne, %1, %c0_i32_0 : i32
    scf.if %2 {
      %c0_8 = arith.constant 0 : index
      %c0_9 = arith.constant 0 : index
      %10 = vector.load %arg2[%c0_8, %c0_9] : memref<16x64xbf16, #tpu.memory_space<vmem>>, vector<16x64xbf16>
      %c0_10 = arith.constant 0 : index
      %c0_11 = arith.constant 0 : index
      %11 = vector.load %arg3[%c0_10, %c0_11] : memref<64x64xbf16, #tpu.memory_space<vmem>>, vector<64x64xbf16>
      %cst_12 = arith.constant dense<0.000000e+00> : vector<16x64xf32>
      %12 = tpu.matmul %10, %11, %cst_12 {dimension_numbers = #tpu.dot_dimension_numbers<[1], [0], [0], [1], [0, 0, 1, 1], [], []>} : vector<16x64xbf16>, vector<64x64xbf16>, vector<16x64xf32> -> vector<16x64xf32>
      %c0_13 = arith.constant 0 : index
      %c0_14 = arith.constant 0 : index
      %13 = vector.load %arg4[%c0_13, %c0_14] : memref<8x64xf32, #tpu.memory_space<vmem>>, vector<8x64xf32>
      %14 = vector.extract_strided_slice %13 {offsets = [0, 0], sizes = [1, 64], strides = [1, 1]} : vector<8x64xf32> to vector<1x64xf32>
      %15 = vector.broadcast %14 : vector<1x64xf32> to vector<16x64xf32>
      %16 = arith.addf %12, %15 : vector<16x64xf32>
      %cst_15 = arith.constant 0.000000e+00 : f32
      %17 = vector.broadcast %cst_15 : f32 to vector<16x64xf32>
      %18 = arith.maximumf %16, %17 : vector<16x64xf32>
      %cst_16 = arith.constant dense<0.000000e+00> : vector<16xf32>
      %19 = vector.multi_reduction <add>, %18, %cst_16 [1] : vector<16x64xf32> to vector<16xf32>
      %20 = vector.shape_cast %19 : vector<16xf32> to vector<16x1xf32>
      %cst_17 = arith.constant 6.400000e+01 : f32
      %21 = vector.broadcast %cst_17 : f32 to vector<16x1xf32>
      %22 = arith.divf %20, %21 : vector<16x1xf32>
      %23 = vector.broadcast %22 : vector<16x1xf32> to vector<16x64xf32>
      %24 = arith.subf %18, %23 : vector<16x64xf32>
      %25 = arith.mulf %24, %24 : vector<16x64xf32>
      %cst_18 = arith.constant dense<0.000000e+00> : vector<16xf32>
      %26 = vector.multi_reduction <add>, %25, %cst_18 [1] : vector<16x64xf32> to vector<16xf32>
      %27 = vector.shape_cast %26 : vector<16xf32> to vector<16x1xf32>
      %cst_19 = arith.constant 6.400000e+01 : f32
      %28 = vector.broadcast %cst_19 : f32 to vector<16x1xf32>
      %29 = arith.divf %27, %28 : vector<16x1xf32>
      %cst_20 = arith.constant 9.99999974E-6 : f32
      %30 = vector.broadcast %cst_20 : f32 to vector<16x1xf32>
      %31 = arith.addf %29, %30 : vector<16x1xf32>
      %32 = math.rsqrt %31 : vector<16x1xf32>
      %33 = vector.broadcast %32 : vector<16x1xf32> to vector<16x64xf32>
      %34 = arith.mulf %24, %33 : vector<16x64xf32>
      %35 = vector.extract_strided_slice %13 {offsets = [1, 0], sizes = [1, 64], strides = [1, 1]} : vector<8x64xf32> to vector<1x64xf32>
      %36 = vector.broadcast %35 : vector<1x64xf32> to vector<16x64xf32>
      %37 = arith.mulf %34, %36 : vector<16x64xf32>
      %38 = vector.extract_strided_slice %13 {offsets = [2, 0], sizes = [1, 64], strides = [1, 1]} : vector<8x64xf32> to vector<1x64xf32>
      %39 = vector.broadcast %38 : vector<1x64xf32> to vector<16x64xf32>
      %40 = arith.addf %37, %39 : vector<16x64xf32>
      %41 = arith.truncf %40 : vector<16x64xf32> to vector<16x64xbf16>
      %c0_21 = arith.constant 0 : index
      %c0_22 = arith.constant 0 : index
      %42 = vector.load %arg8[%c0_21, %c0_22] : memref<16x64xbf16, #tpu.memory_space<vmem>>, vector<16x64xbf16>
      tpu.vector_store %arg8[%c0_21, %c0_22], %41 {strides = array<i32>} : memref<16x64xbf16, #tpu.memory_space<vmem>>, vector<16x64xbf16>,
    } else {
    }
    %c0 = arith.constant 0 : index
    %c0_1 = arith.constant 0 : index
    %3 = vector.load %arg8[%c0, %c0_1] : memref<16x64xbf16, #tpu.memory_space<vmem>>, vector<16x64xbf16>
    %c0_2 = arith.constant 0 : index
    %c0_3 = arith.constant 0 : index
    %4 = vector.load %arg5[%c0_2, %c0_3] : memref<64x256xbf16, #tpu.memory_space<vmem>>, vector<64x256xbf16>
    %cst = arith.constant dense<0.000000e+00> : vector<16x256xf32>
    %5 = tpu.matmul %3, %4, %cst {dimension_numbers = #tpu.dot_dimension_numbers<[1], [0], [0], [1], [0, 0, 1, 1], [], []>} : vector<16x64xbf16>, vector<64x256xbf16>, vector<16x256xf32> -> vector<16x256xf32>
    %c0_4 = arith.constant 0 : index
    %c0_5 = arith.constant 0 : index
    %6 = vector.load %arg6[%c0_4, %c0_5] : memref<1x256xf32, #tpu.memory_space<vmem>>, vector<1x256xf32>
    %7 = vector.broadcast %6 : vector<1x256xf32> to vector<16x256xf32>
    %8 = arith.addf %5, %7 : vector<16x256xf32>
    %c0_6 = arith.constant 0 : index
    %c0_7 = arith.constant 0 : index
    %9 = vector.load %arg7[%c0_6, %c0_7] : memref<16x256xf32, #tpu.memory_space<vmem>>, vector<16x256xf32>
    tpu.vector_store %arg7[%c0_6, %c0_7], %8 {strides = array<i32>} : memref<16x256xf32, #tpu.memory_space<vmem>>, vector<16x256xf32>,
    return
  }
  func.func @transform_0(%arg0: i32, %arg1: i32) -> (i32, i32) {
    %c0_i32 = arith.constant 0 : i32
    %c0_i32_0 = arith.constant 0 : i32
    return %arg0, %c0_i32 : i32, i32
  }
  func.func @transform_1(%arg0: i32, %arg1: i32) -> (i32, i32) {
    %c0_i32 = arith.constant 0 : i32
    %c0_i32_0 = arith.constant 0 : i32
    %c0_i32_1 = arith.constant 0 : i32
    return %c0_i32, %c0_i32_0 : i32, i32
  }
  func.func @transform_2(%arg0: i32, %arg1: i32) -> (i32, i32) {
    %c0_i32 = arith.constant 0 : i32
    %c0_i32_0 = arith.constant 0 : i32
    %c0_i32_1 = arith.constant 0 : i32
    return %c0_i32, %c0_i32_0 : i32, i32
  }
  func.func @transform_3(%arg0: i32, %arg1: i32) -> (i32, i32) {
    %c0_i32 = arith.constant 0 : i32
    %c0_i32_0 = arith.constant 0 : i32
    return %c0_i32, %arg1 : i32, i32
  }
  func.func @transform_4(%arg0: i32, %arg1: i32) -> (i32, i32) {
    %c0_i32 = arith.constant 0 : i32
    %c0_i32_0 = arith.constant 0 : i32
    return %c0_i32, %arg1 : i32, i32
  }
  func.func @transform_5(%arg0: i32, %arg1: i32) -> (i32, i32) {
    %c0_i32 = arith.constant 0 : i32
    return %arg0, %arg1 : i32, i32
  }
}

</mosaic_0001>

<llo_original>
// kernel: tpu_custom_call.1
$region0: #{tpu_custom_call.1}
  #allocation0 [shape = 'u32[]', space=smem, size = 0x4, offset = 0x4, fixed_abs, tag = 'smem constant byte address 0x4 - core index']
  #allocation1 [shape = 'u32[144,128]{1,0:T(1,128)}', space=vmem, size = 0x12000, scoped, tag = 'internal scratch']
  #allocation2 [shape = 'bf16[16,64]{1,0:T(16,128)(2,1)}', space=vmem, size = 0x1000, scoped, tag = 'scratch operand']
  %s0 = inlined_call_operand.hbm [shape: bf16[16,64], index: 0, kind: input, shape index: {}]
  %s1 = inlined_call_operand.hbm [shape: bf16[64,64], index: 1, kind: input, shape index: {}]
  %s2 = inlined_call_operand.hbm [shape: f32[8,64], index: 2, kind: input, shape index: {}]
  %s3 = inlined_call_operand.hbm [shape: bf16[64,256], index: 3, kind: input, shape index: {}]
  %s4 = inlined_call_operand.vmem [shape: f32[1,256], index: 4, kind: input, shape index: {}]
  %s5 = inlined_call_operand.hbm [shape: f32[16,256], index: 5, kind: output, shape index: {}]
  %s6 = sld [smem:[#allocation0]]
  $region50: #{tpu_custom_call.1} parent=0
    _
  %s8 = ssub.s32 1, %s6
  %s9 = scalar_select 0, %s8, %s6
  $region1: #{tpu_custom_call.1} parent=0
    #allocation3 [shape = 'u8[4096]{0}', space=vmem, size = 0x1000, scoped, tag = 'input window, operand 0, single buffered']
    #allocation4 [shape = 's32[1]{0}', space=sflag, size = 0x4, scoped, tag = 'scoped memory for tpu_custom_call.1']
    #allocation5 [shape = 's32[1]{0}', space=sflag, size = 0x4, scoped, tag = 'scoped memory for tpu_custom_call.1']
    #allocation6 [shape = 'u8[16384]{0}', space=vmem, size = 0x4000, scoped, tag = 'input window, operand 1, single buffered']
    #allocation7 [shape = 's32[1]{0}', space=sflag, size = 0x4, scoped, tag = 'scoped memory for tpu_custom_call.1']
    #allocation8 [shape = 'u8[4096]{0}', space=vmem, size = 0x1000, scoped, tag = 'input window, operand 2, single buffered']
    #allocation9 [shape = 'u8[32768]{0}', space=vmem, size = 0x8000, scoped, tag = 'input window, operand 3, single buffered']
    #allocation10 [shape = 's32[1]{0}', space=sflag, size = 0x4, scoped, tag = 'scoped memory for tpu_custom_call.1']
    #allocation11 [shape = 'u8[16384]{0}', space=vmem, size = 0x4000, scoped, tag = 'output window, operand 0, single buffered']
    %10 = vsyncpa [#allocation4], 0
    %11 = vsyncpa [#allocation7], 0
    %12 = vsyncpa [#allocation10], 0
    %13 = vsyncpa [#allocation5], 0
    // Predicated region
    $region2: #{tpu_custom_call.1} parent=1 // pred_check
      _
    $region3: #{tpu_custom_call.1} parent=1 // pred_check_branch
      %15 = sbr.rel (0) target = $region5
    $region4: #{tpu_custom_call.1} parent=1 // pred_region
      %s17 = ssub.s32 128, 128
      %18 = vsyncadd [#allocation4], %s17
      %s19 = sshll.u32 [#allocation3], 4
      %s20 = int_to_ptr.vmem [resolvable:$true] %s19
      %25 = dma.hbm_to_vmem [thread:$0]  %s0, 128, %s20, [#allocation4], 64, 64, 4
    $region5: #{tpu_custom_call.1} parent=1 // pred_fallthru
      _
    // Predicated region
    $region6: #{tpu_custom_call.1} parent=1 // pred_check
      _
    $region7: #{tpu_custom_call.1} parent=1 // pred_check_branch
      %27 = sbr.rel (0) target = $region9
    $region8: #{tpu_custom_call.1} parent=1 // pred_region
      %s29 = ssub.s32 512, 512
      %30 = vsyncadd [#allocation7], %s29
      %s31 = sshll.u32 [#allocation6], 4
      %s32 = int_to_ptr.vmem [resolvable:$true] %s31
      %37 = dma.hbm_to_vmem [thread:$0]  %s1, 512, %s32, [#allocation7], 64, 64, 4
    $region9: #{tpu_custom_call.1} parent=1 // pred_fallthru
      _
    // Predicated region
    $region10: #{tpu_custom_call.1} parent=1 // pred_check
      _
    $region11: #{tpu_custom_call.1} parent=1 // pred_check_branch
      %39 = sbr.rel (0) target = $region13
    $region12: #{tpu_custom_call.1} parent=1 // pred_region
      %s41 = ssub.s32 128, 128
      %42 = vsyncadd [#allocation7], %s41
      %s44 = sshll.u32 [#allocation8], 4
      %s45 = int_to_ptr.vmem [resolvable:$true] %s44
      %47 = dma.hbm_to_vmem [thread:$0]  %s2, 128, %s45, [#allocation7]
    $region13: #{tpu_custom_call.1} parent=1 // pred_fallthru
      _
    // Predicated region
    $region14: #{tpu_custom_call.1} parent=1 // pred_check
      _
    $region15: #{tpu_custom_call.1} parent=1 // pred_check_branch
      %49 = sbr.rel (0) target = $region17
    $region16: #{tpu_custom_call.1} parent=1 // pred_region
      %s51 = ssub.s32 1024, 1024
      %52 = vsyncadd [#allocation10], %s51
      %s53 = sshll.u32 [#allocation9], 4
      %s54 = int_to_ptr.vmem [resolvable:$true] %s53
      %59 = dma.hbm_to_vmem [thread:$0]  %s3, 1024, %s54, [#allocation10], 128, 128, 8
    $region17: #{tpu_custom_call.1} parent=1 // pred_fallthru
      _
    // Predicated region
    $region18: #{tpu_custom_call.1} parent=1 // pred_check
      _
    $region19: #{tpu_custom_call.1} parent=1 // pred_check_branch
      %61 = sbr.rel (0) target = $region21
    $region20: #{tpu_custom_call.1} parent=1 // pred_region
      _
    $region21: #{tpu_custom_call.1} parent=1 // pred_fallthru
      _
    // Predicated region
    $region22: #{tpu_custom_call.1} parent=1 // pred_check
      _
    $region23: #{tpu_custom_call.1} parent=1 // pred_check_branch
      %63 = sbr.rel (0) target = $region25
    $region24: #{tpu_custom_call.1} parent=1 // pred_region
      %64 = dma.done [#allocation4], 128
    $region25: #{tpu_custom_call.1} parent=1 // pred_fallthru
      _
    // Predicated region
    $region26: #{tpu_custom_call.1} parent=1 // pred_check
      _
    $region27: #{tpu_custom_call.1} parent=1 // pred_check_branch
      %66 = sbr.rel (0) target = $region29
    $region28: #{tpu_custom_call.1} parent=1 // pred_region
      %67 = dma.done [#allocation7], 512
    $region29: #{tpu_custom_call.1} parent=1 // pred_fallthru
      _
    // Predicated region
    $region30: #{tpu_custom_call.1} parent=1 // pred_check
      _
    $region31: #{tpu_custom_call.1} parent=1 // pred_check_branch
      %69 = sbr.rel (0) target = $region33
    $region32: #{tpu_custom_call.1} parent=1 // pred_region
      %70 = dma.done [#allocation7], 128
    $region33: #{tpu_custom_call.1} parent=1 // pred_fallthru
      _
    // Predicated region
    $region34: #{tpu_custom_call.1} parent=1 // pred_check
      _
    $region35: #{tpu_custom_call.1} parent=1 // pred_check_branch
      %72 = sbr.rel (0) target = $region37
    $region36: #{tpu_custom_call.1} parent=1 // pred_region
      %73 = dma.done [#allocation10], 1024
    $region37: #{tpu_custom_call.1} parent=1 // pred_fallthru
      _
    %p75 = scmp.eq.s32.totalorder 0, 0
    // Predicated region
    $region38: #{tpu_custom_call.1} parent=1 // pred_check
      %p76 = pneg %p75
    $region39: #{tpu_custom_call.1} parent=1 // pred_check_branch
      %78 = sbr.rel (%p76) target = $region41
    $region40: #{tpu_custom_call.1} parent=1 // pred_region
      %v79 = vld [vmem:[#allocation3] sm:$0xf]
      %v80 = vld [vmem:[#allocation3 + $0x4] sm:$0xf]
      %v81 = vld [vmem:[#allocation6] sm:$0xf]
      %v82 = vld [vmem:[#allocation6 + $0x4] sm:$0xf]
      %v83 = vld [vmem:[#allocation6 + $0x8] sm:$0xf]
      %v84 = vld [vmem:[#allocation6 + $0xc] sm:$0xf]
      %v85 = vld [vmem:[#allocation6 + $0x10] sm:$0xf]
      %v86 = vld [vmem:[#allocation6 + $0x14] sm:$0xf]
      %v87 = vld [vmem:[#allocation6 + $0x18] sm:$0xf]
      %v88 = vld [vmem:[#allocation6 + $0x1c] sm:$0xf]
      %v89 = vld [vmem:[#allocation8] sm:$0xff]
      %v90 = vlaneseq
      %v91 = vshrl.u32 %v90, 7
      %v92 = vsub.s32 0, %v91
      %v93 = vrot.slane %v89, %v92
      %v96 = vunpack.c.l.b16 %v79
      %v97 = vunpack.c.l.b16 %v80
      %v98 = vpack.c.b16 %v97, %v96
      %v107 = vunpack.c.l.b16 %v81
      %v108 = vunpack.c.l.b16 %v82
      %v109 = vunpack.c.l.b16 %v83
      %v110 = vunpack.c.l.b16 %v84
      %v111 = vunpack.c.l.b16 %v85
      %v112 = vunpack.c.l.b16 %v86
      %v113 = vunpack.c.l.b16 %v87
      %v114 = vunpack.c.l.b16 %v88
      %v115 = vpack.c.b16 %v108, %v107
      %v116 = vpack.c.b16 %v110, %v109
      %v117 = vpack.c.b16 %v112, %v111
      %v118 = vpack.c.b16 %v114, %v113
      %vm123 = vcmask 523264
      %v125 = vsel %vm123, %v98, 0
      %127 = vmatprep.subr.bf16.mxu0 0
      %128 = vmatpush1.bf16.msra.mxu0 %v115
      %129 = vmatprep.subr.bf16.mxu0 0
      %130 = vmatpush1.bf16.msra.mxu0 %v116
      %131 = vmatprep.subr.bf16.mxu0 0
      %132 = vmatpush1.bf16.msra.mxu0 %v117
      %133 = vmatprep.subr.bf16.mxu0 0
      %134 = vmatpush1.bf16.msra.mxu0 %v118
      %135 = vmatprep.subr.bf16.mxu0 0
      %136 = vmatpush1.bf16.msra.mxu0 0
      %137 = vmatprep.subr.bf16.mxu0 0
      %138 = vmatpush1.bf16.msra.mxu0 0
      %139 = vmatprep.subr.bf16.mxu0 0
      %140 = vmatpush1.bf16.msra.mxu0 0
      %141 = vmatprep.subr.bf16.mxu0 0
      %142 = vmatpush1.bf16.msra.mxu0 0
      %143 = vmatprep.subr.bf16.mxu0 0
      %144 = vmatpush1.bf16.msra.mxu0 0
      %145 = vmatprep.subr.bf16.mxu0 0
      %146 = vmatpush1.bf16.msra.mxu0 0
      %147 = vmatprep.subr.bf16.mxu0 0
      %148 = vmatpush1.bf16.msra.mxu0 0
      %149 = vmatprep.subr.bf16.mxu0 0
      %150 = vmatpush1.bf16.msra.mxu0 0
      %151 = vmatprep.subr.bf16.mxu0 0
      %152 = vmatpush1.bf16.msra.mxu0 0
      %153 = vmatprep.subr.bf16.mxu0 0
      %154 = vmatpush1.bf16.msra.mxu0 0
      %155 = vmatprep.subr.bf16.mxu0 0
      %156 = vmatpush1.bf16.msra.mxu0 0
      %157 = vmatprep.subr.bf16.mxu0 0
      %158 = vmatpush1.bf16.msra.mxu0 0
      %159 = vmatprep.mubr.bf16.mxu0 0
      %160 = vmatmul.mubr.bf16.gmra.mrb[0].mxu0 %v125
      %v161 = vpop.f32.mrb[0].mxu0
      %v162 = vadd.f32 %v93, %v161
      %v163 = vpop.f32.mrb[0].mxu0
      %v164 = vpop.f32.mrb[0].mxu0
      %v165 = vadd.f32 %v93, %v164
      %v166 = vpop.f32.mrb[0].mxu0
      %167 = vdwg.mxu0
      %v168 = vmax.f32 %v162, 0.0
      %v169 = vmax.f32 %v165, 0.0
      %v170 = vsel %vm123, %v168, 0.0
      %171 = vadd.xlane.f32.xlu0 %v170
      %v172 = vpop.xlane.xlu0 %171
      %v173 = vsel %vm123, %v169, 0.0
      %174 = vadd.xlane.f32.xlu0 %v173
      %v175 = vpop.xlane.xlu0 %174
      %v176 = vrcp.pop 64.0
      %v177 = vmul.f32 %v172, %v176
      %v178 = vmul.f32 %v175, %v176
      %v179 = vsub.f32 %v168, %v177
      %v180 = vsub.f32 %v169, %v178
      %v181 = vmul.f32 %v179, %v179
      %v182 = vmul.f32 %v180, %v180
      %v183 = vsel %vm123, %v181, 0.0
      %184 = vadd.xlane.f32.xlu0 %v183
      %v185 = vpop.xlane.xlu0 %184
      %v186 = vsel %vm123, %v182, 0.0
      %187 = vadd.xlane.f32.xlu0 %v186
      %v188 = vpop.xlane.xlu0 %187
      %v189 = vmul.f32 %v185, %v176
      %v190 = vmul.f32 %v188, %v176
      %v191 = vadd.f32 %v189, 1e-05
      %v192 = vadd.f32 %v190, 1e-05
      %v193 = vrsqrt.pop %v191
      %v194 = vrsqrt.pop %v192
      %v195 = vmul.f32 %v179, %v193
      %v196 = vmul.f32 %v180, %v194
      %v197 = vlaneseq
      %v198 = vshrl.u32 %v197, 7
      %v199 = vsub.s32 1, %v198
      %v200 = vrot.slane %v89, %v199
      %v201 = vmul.f32 %v195, %v200
      %v202 = vmul.f32 %v196, %v200
      %v203 = vlaneseq
      %v204 = vshrl.u32 %v203, 7
      %v205 = vsub.s32 2, %v204
      %v206 = vrot.slane %v89, %v205
      %v207 = vadd.f32 %v201, %v206
      %v208 = vadd.f32 %v202, %v206
      %v209 = vpack.c.bf16 %v208, %v207
      %210 = vst.msk [vmem:[#allocation2] sm:$0xff] %vm123, %v209
    $region41: #{tpu_custom_call.1} parent=1 // pred_fallthru
      _
    %v211 = vld [vmem:[#allocation2] sm:$0xff]
    %v212 = vld [vmem:[#allocation9] sm:$0xff]
    %v213 = vld [vmem:[#allocation9 + $0x8] sm:$0xff]
    %v214 = vld [vmem:[#allocation9 + $0x10] sm:$0xff]
    %v215 = vld [vmem:[#allocation9 + $0x18] sm:$0xff]
    %v216 = vld [vmem:[#allocation9 + $0x20] sm:$0xff]
    %v217 = vld [vmem:[#allocation9 + $0x28] sm:$0xff]
    %v218 = vld [vmem:[#allocation9 + $0x30] sm:$0xff]
    %v219 = vld [vmem:[#allocation9 + $0x38] sm:$0xff]
    %v220 = vld [vmem:[%s4] sm:$0x3]
    %v222 = vlaneseq
    %v223 = vshrl.u32 %v222, 7
    %v224 = vsub.s32 0, %v223
    %v225 = vrot.slane %v220, %v224
    %v226 = vlaneseq
    %v227 = vshrl.u32 %v226, 7
    %v228 = vsub.s32 1, %v227
    %v229 = vrot.slane %v220, %v228
    %v240 = vunpack.c.l.b16 %v212
    %v241 = vunpack.c.h.b16 %v212
    %v242 = vunpack.c.l.b16 %v213
    %v243 = vunpack.c.h.b16 %v213
    %v244 = vunpack.c.l.b16 %v214
    %v245 = vunpack.c.h.b16 %v214
    %v246 = vunpack.c.l.b16 %v215
    %v247 = vunpack.c.h.b16 %v215
    %v248 = vunpack.c.l.b16 %v216
    %v249 = vunpack.c.h.b16 %v216
    %v250 = vunpack.c.l.b16 %v217
    %v251 = vunpack.c.h.b16 %v217
    %v252 = vunpack.c.l.b16 %v218
    %v253 = vunpack.c.h.b16 %v218
    %v254 = vunpack.c.l.b16 %v219
    %v255 = vunpack.c.h.b16 %v219
    %v256 = vpack.c.b16 %v242, %v240
    %v257 = vpack.c.b16 %v243, %v241
    %v258 = vpack.c.b16 %v246, %v244
    %v259 = vpack.c.b16 %v247, %v245
    %v260 = vpack.c.b16 %v250, %v248
    %v261 = vpack.c.b16 %v251, %v249
    %v262 = vpack.c.b16 %v254, %v252
    %v263 = vpack.c.b16 %v255, %v253
    %vm272 = vcmask 523264
    %v274 = vsel %vm272, %v211, 0
    %276 = vmatprep.subr.bf16.mxu0 %v257
    %277 = vmatpush1.bf16.msra.mxu0 %v256
    %278 = vmatprep.subr.bf16.mxu0 %v259
    %279 = vmatpush1.bf16.msra.mxu0 %v258
    %280 = vmatprep.subr.bf16.mxu0 %v261
    %281 = vmatpush1.bf16.msra.mxu0 %v260
    %282 = vmatprep.subr.bf16.mxu0 %v263
    %283 = vmatpush1.bf16.msra.mxu0 %v262
    %284 = vmatprep.subr.bf16.mxu0 0
    %285 = vmatpush1.bf16.msra.mxu0 0
    %286 = vmatprep.subr.bf16.mxu0 0
    %287 = vmatpush1.bf16.msra.mxu0 0
    %288 = vmatprep.subr.bf16.mxu0 0
    %289 = vmatpush1.bf16.msra.mxu0 0
    %290 = vmatprep.subr.bf16.mxu0 0
    %291 = vmatpush1.bf16.msra.mxu0 0
    %292 = vmatprep.subr.bf16.mxu0 0
    %293 = vmatpush1.bf16.msra.mxu0 0
    %294 = vmatprep.subr.bf16.mxu0 0
    %295 = vmatpush1.bf16.msra.mxu0 0
    %296 = vmatprep.subr.bf16.mxu0 0
    %297 = vmatpush1.bf16.msra.mxu0 0
    %298 = vmatprep.subr.bf16.mxu0 0
    %299 = vmatpush1.bf16.msra.mxu0 0
    %300 = vmatprep.subr.bf16.mxu0 0
    %301 = vmatpush1.bf16.msra.mxu0 0
    %302 = vmatprep.subr.bf16.mxu0 0
    %303 = vmatpush1.bf16.msra.mxu0 0
    %304 = vmatprep.subr.bf16.mxu0 0
    %305 = vmatpush1.bf16.msra.mxu0 0
    %306 = vmatprep.subr.bf16.mxu0 0
    %307 = vmatpush1.bf16.msra.mxu0 0
    %308 = vmatprep.mubr.bf16.mxu0 0
    %309 = vmatmul.mubr.bf16.gmra.mrb[0].mxu0 %v274
    %v310 = vpop.f32.mrb[0].mxu0
    %v311 = vadd.f32 %v225, %v310
    %v312 = vpop.f32.mrb[0].mxu0
    %v313 = vadd.f32 %v229, %v312
    %v314 = vpop.f32.mrb[0].mxu0
    %v315 = vadd.f32 %v225, %v314
    %v316 = vpop.f32.mrb[0].mxu0
    %v317 = vadd.f32 %v229, %v316
    %318 = vdwg.mxu0
    %319 = vst [vmem:[#allocation11] sm:$0xff] %v311
    %320 = vst [vmem:[#allocation11 + $0x8] sm:$0xff] %v313
    %321 = vst [vmem:[#allocation11 + $0x10] sm:$0xff] %v315
    %322 = vst [vmem:[#allocation11 + $0x18] sm:$0xff] %v317
    // Predicated region
    $region42: #{tpu_custom_call.1} parent=1 // pred_check
      _
    $region43: #{tpu_custom_call.1} parent=1 // pred_check_branch
      %324 = sbr.rel (0) target = $region45
    $region44: #{tpu_custom_call.1} parent=1 // pred_region
      %s326 = ssub.s32 512, 512
      %327 = vsyncadd [#allocation5], %s326
      %s328 = sshll.u32 [#allocation11], 4
      %s329 = int_to_ptr.vmem [resolvable:$true] %s328
      %334 = dma.vmem_to_hbm [thread:$0]  %s329, 512, %s5, [#allocation5], 256, 256, 16
    $region45: #{tpu_custom_call.1} parent=1 // pred_fallthru
      _
    // Predicated region
    $region46: #{tpu_custom_call.1} parent=1 // pred_check
      _
    $region47: #{tpu_custom_call.1} parent=1 // pred_check_branch
      %336 = sbr.rel (0) target = $region49
    $region48: #{tpu_custom_call.1} parent=1 // pred_region
      %337 = dma.done [#allocation5], 512
    $region49: #{tpu_custom_call.1} parent=1 // pred_fallthru
      _
    %338 = vsyncpa [#allocation4], 1
    %339 = vsyncpa [#allocation7], 1
    %340 = vsyncpa [#allocation10], 1
    %341 = vsyncpa [#allocation5], 1

</llo_original>
